<compile_context>
chip_gen: v7x
topology: tpu7x:2x2x1
jax: 0.10.0
libtpu: 0.0.40
codegen_flags: <defaults>
</compile_context>

<pallas_src>
import jax
import jax.numpy as jnp
from jax.experimental import pallas as pl
from jax.experimental.pallas import tpu as pltpu


def _augmax_kernel(c_ref, x0_ref, x1_ref, x2_ref, x3_ref, o_ref):
    # c_ref: SMEM (4, N) mixing coefficients (scalar-prefetch).
    # x*_ref / o_ref: VMEM tiles of shape (1, block_rows, 128).
    i = pl.program_id(0)
    c0 = c_ref[0, i]
    c1 = c_ref[1, i]
    c2 = c_ref[2, i]
    c3 = c_ref[3, i]
    mix = (c0 * x0_ref[...] + c1 * x1_ref[...]
           + c2 * x2_ref[...] + c3 * x3_ref[...])
    o_ref[...] = mix.astype(o_ref.dtype)


def _slab_layout(chw, itemsize, target_block_bytes):
    """Per-sample slab layout: (rows, 128) with rows-block sized toward target.

    Returns (rows, lanes, block_rows, padded_chw).  block_rows is a multiple
    of 8 or equals the full row extent (both legal under the (8,128) rule).
    """
    lanes = 128
    rows = pl.cdiv(chw, lanes)
    padded_chw = rows * lanes
    if rows <= 8:
        block_rows = rows                                    # full extent
    else:
        block_rows = (target_block_bytes // (lanes * itemsize)) // 8 * 8
        block_rows = int(max(8, min(block_rows, rows)))
    return rows, lanes, block_rows, padded_chw


def augmax_forward(xs, m, q, *, target_block_bytes=1 << 20):
    """xs = (x_ori, x_aug1, x_aug2, x_aug3), each (N, C, H, W); m: (N,); q: (N, 3)."""
    x_ori, x_a1, x_a2, x_a3 = xs
    N, C, H, W = x_ori.shape
    chw = C * H * W
    dtype = x_ori.dtype
    itemsize = jnp.dtype(dtype).itemsize

    # Fold m into the softmax weights: out = c0*x0 + c1*x1 + c2*x2 + c3*x3.
    # Laid out (4, N): long axis last -> minimal SMEM padding.
    w = jax.nn.softmax(q.astype(jnp.float32), axis=1)           # (N, 3)
    m32 = m.astype(jnp.float32)
    coefs = jnp.concatenate(
        [(1.0 - m32)[None, :], m32[None, :] * w.T], axis=0)     # (4, N) f32

    rows, lanes, block_rows, padded_chw = _slab_layout(
        chw, itemsize, target_block_bytes)
    row_blocks = pl.cdiv(rows, block_rows)
    pad = padded_chw - chw

    def to_slab(x):
        x = x.reshape(N, chw)
        if pad:
            # Zero-pad the flat sample so the last dim is lane-dense (128-mult).
            x = jnp.pad(x, ((0, 0), (0, pad)))
        return x.reshape(N, rows, lanes)

    blk = pl.BlockSpec((1, block_rows, lanes), lambda i, j, c: (i, j, 0))

    out = pl.pallas_call(
        _augmax_kernel,
        out_shape=jax.ShapeDtypeStruct((N, rows, lanes), dtype),
        grid_spec=pltpu.PrefetchScalarGridSpec(
            num_scalar_prefetch=1,           # coefs land in SMEM
            grid=(N, row_blocks),
            in_specs=[blk, blk, blk, blk],
            out_specs=blk,
        ),
        compiler_params=pltpu.CompilerParams(
            dimension_semantics=("parallel", "parallel"),
        ),
        cost_estimate=pl.CostEstimate(
            flops=7 * N * padded_chw,
            transcendentals=0,
            bytes_accessed=5 * N * padded_chw * itemsize,
        ),
    )(coefs, to_slab(x_ori), to_slab(x_a1), to_slab(x_a2), to_slab(x_a3))

    out = out.reshape(N, padded_chw)
    if pad:
        out = out[:, :chw]
    return out.reshape(N, C, H, W)


def _augmax_reference(xs, m, q):
    x_ori, x_a1, x_a2, x_a3 = xs
    w = jax.nn.softmax(q, axis=1)
    N = x_ori.shape[0]
    w_ = w.reshape(N, 3, 1, 1, 1)
    x_mix = w_[:, 0] * x_a1 + w_[:, 1] * x_a2 + w_[:, 2] * x_a3
    m_ = m.reshape(N, 1, 1, 1)
    return (1.0 - m_) * x_ori + m_ * x_mix


if __name__ == "__main__":
    key = jax.random.PRNGKey(0)
    N, C, H, W = 2, 4, 16, 16

    k0, k1, k2, k3, km, kq = jax.random.split(key, 6)
    x_ori = jax.random.normal(k0, (N, C, H, W), dtype=jnp.float32)
    x_a1 = jax.random.normal(k1, (N, C, H, W), dtype=jnp.float32)
    x_a2 = jax.random.normal(k2, (N, C, H, W), dtype=jnp.float32)
    x_a3 = jax.random.normal(k3, (N, C, H, W), dtype=jnp.float32)
    m = jax.random.uniform(km, (N,), dtype=jnp.float32)
    q = jax.random.normal(kq, (N, 3), dtype=jnp.float32)

    xs = (x_ori, x_a1, x_a2, x_a3)

    out = augmax_forward(xs, m, q)
    out = jax.block_until_ready(out)

    ref = _augmax_reference(xs, m, q)
    assert out.shape == (N, C, H, W)
    assert jnp.allclose(out, ref, atol=1e-5, rtol=1e-5), "mismatch vs reference"

    print("KERNEL_OK")
</pallas_src>

<mosaic_0001>
module attributes {stable_mosaic.version = 11 : i64} {
  func.func @_augmax_kernel(%arg0: i32, %arg1: i32, %arg2: memref<4x2xf32, #tpu.memory_space<smem>>, %arg3: memref<1x8x128xf32, #tpu.memory_space<vmem>>, %arg4: memref<1x8x128xf32, #tpu.memory_space<vmem>>, %arg5: memref<1x8x128xf32, #tpu.memory_space<vmem>>, %arg6: memref<1x8x128xf32, #tpu.memory_space<vmem>>, %arg7: memref<1x8x128xf32, #tpu.memory_space<vmem>>) attributes {dimension_semantics = [#tpu.dimension_semantics<parallel>, #tpu.dimension_semantics<parallel>], iteration_bounds = array<i64: 2, 1>, scalar_prefetch = 1 : i64, scratch_operands = 0 : i64, tpu.core_type = #tpu.core_type<tc>, window_params = [{transform_indices = @transform_0, window_bounds = array<i64: 1, 8, 128>}, {transform_indices = @transform_1, window_bounds = array<i64: 1, 8, 128>}, {transform_indices = @transform_2, window_bounds = array<i64: 1, 8, 128>}, {transform_indices = @transform_3, window_bounds = array<i64: 1, 8, 128>}, {transform_indices = @transform_4, window_bounds = array<i64: 1, 8, 128>}]} {
    %c0 = arith.constant 0 : index
    %0 = arith.index_cast %arg0 : i32 to index
    %1 = memref.load %arg2[%c0, %0] : memref<4x2xf32, #tpu.memory_space<smem>>
    %c1 = arith.constant 1 : index
    %2 = arith.index_cast %arg0 : i32 to index
    %3 = memref.load %arg2[%c1, %2] : memref<4x2xf32, #tpu.memory_space<smem>>
    %c2 = arith.constant 2 : index
    %4 = arith.index_cast %arg0 : i32 to index
    %5 = memref.load %arg2[%c2, %4] : memref<4x2xf32, #tpu.memory_space<smem>>
    %c3 = arith.constant 3 : index
    %6 = arith.index_cast %arg0 : i32 to index
    %7 = memref.load %arg2[%c3, %6] : memref<4x2xf32, #tpu.memory_space<smem>>
    %c0_0 = arith.constant 0 : index
    %c0_1 = arith.constant 0 : index
    %c0_2 = arith.constant 0 : index
    %8 = vector.load %arg3[%c0_0, %c0_1, %c0_2] : memref<1x8x128xf32, #tpu.memory_space<vmem>>, vector<1x8x128xf32>
    %9 = vector.broadcast %1 : f32 to vector<1x8x128xf32>
    %10 = arith.mulf %9, %8 : vector<1x8x128xf32>
    %c0_3 = arith.constant 0 : index
    %c0_4 = arith.constant 0 : index
    %c0_5 = arith.constant 0 : index
    %11 = vector.load %arg4[%c0_3, %c0_4, %c0_5] : memref<1x8x128xf32, #tpu.memory_space<vmem>>, vector<1x8x128xf32>
    %12 = vector.broadcast %3 : f32 to vector<1x8x128xf32>
    %13 = arith.mulf %12, %11 : vector<1x8x128xf32>
    %14 = arith.addf %10, %13 : vector<1x8x128xf32>
    %c0_6 = arith.constant 0 : index
    %c0_7 = arith.constant 0 : index
    %c0_8 = arith.constant 0 : index
    %15 = vector.load %arg5[%c0_6, %c0_7, %c0_8] : memref<1x8x128xf32, #tpu.memory_space<vmem>>, vector<1x8x128xf32>
    %16 = vector.broadcast %5 : f32 to vector<1x8x128xf32>
    %17 = arith.mulf %16, %15 : vector<1x8x128xf32>
    %18 = arith.addf %14, %17 : vector<1x8x128xf32>
    %c0_9 = arith.constant 0 : index
    %c0_10 = arith.constant 0 : index
    %c0_11 = arith.constant 0 : index
    %19 = vector.load %arg6[%c0_9, %c0_10, %c0_11] : memref<1x8x128xf32, #tpu.memory_space<vmem>>, vector<1x8x128xf32>
    %20 = vector.broadcast %7 : f32 to vector<1x8x128xf32>
    %21 = arith.mulf %20, %19 : vector<1x8x128xf32>
    %22 = arith.addf %18, %21 : vector<1x8x128xf32>
    %c0_12 = arith.constant 0 : index
    %c0_13 = arith.constant 0 : index
    %c0_14 = arith.constant 0 : index
    %23 = vector.load %arg7[%c0_12, %c0_13, %c0_14] : memref<1x8x128xf32, #tpu.memory_space<vmem>>, vector<1x8x128xf32>
    tpu.vector_store %arg7[%c0_12, %c0_13, %c0_14], %22 {strides = array<i32>} : memref<1x8x128xf32, #tpu.memory_space<vmem>>, vector<1x8x128xf32>,
    return
  }
  func.func @transform_0(%arg0: i32, %arg1: i32, %arg2: memref<4x2xf32, #tpu.memory_space<smem>>) -> (i32, i32, i32) {
    %c0_i32 = arith.constant 0 : i32
    %c0_i32_0 = arith.constant 0 : i32
    return %arg0, %arg1, %c0_i32 : i32, i32, i32
  }
  func.func @transform_1(%arg0: i32, %arg1: i32, %arg2: memref<4x2xf32, #tpu.memory_space<smem>>) -> (i32, i32, i32) {
    %c0_i32 = arith.constant 0 : i32
    %c0_i32_0 = arith.constant 0 : i32
    return %arg0, %arg1, %c0_i32 : i32, i32, i32
  }
  func.func @transform_2(%arg0: i32, %arg1: i32, %arg2: memref<4x2xf32, #tpu.memory_space<smem>>) -> (i32, i32, i32) {
    %c0_i32 = arith.constant 0 : i32
    %c0_i32_0 = arith.constant 0 : i32
    return %arg0, %arg1, %c0_i32 : i32, i32, i32
  }
  func.func @transform_3(%arg0: i32, %arg1: i32, %arg2: memref<4x2xf32, #tpu.memory_space<smem>>) -> (i32, i32, i32) {
    %c0_i32 = arith.constant 0 : i32
    %c0_i32_0 = arith.constant 0 : i32
    return %arg0, %arg1, %c0_i32 : i32, i32, i32
  }
  func.func @transform_4(%arg0: i32, %arg1: i32, %arg2: memref<4x2xf32, #tpu.memory_space<smem>>) -> (i32, i32, i32) {
    %c0_i32 = arith.constant 0 : i32
    %c0_i32_0 = arith.constant 0 : i32
    return %arg0, %arg1, %c0_i32 : i32, i32, i32
  }
}

</mosaic_0001>

<llo_original>
// kernel: tpu_custom_call.1
$region0: #{tpu_custom_call.1}
  #allocation0 [shape = 'u32[]', space=smem, size = 0x4, offset = 0x4, fixed_abs, tag = 'smem constant byte address 0x4 - core index']
  #allocation1 [shape = 'u32[144,128]{1,0:T(1,128)}', space=vmem, size = 0x12000, scoped, tag = 'internal scratch']
  #allocation2 [shape = 's32[1]{0}', space=sflag, size = 0x4, scoped, tag = 'scoped memory for tpu_custom_call.1']
  #allocation3 [shape = 'u8[2048]{0}', space=smem, size = 0x800, scoped, tag = 'prefetched SMEM operand 0']
  %s0 = inlined_call_operand.vmem [shape: f32[4,2], index: 0, kind: input, shape index: {}]
  %s1 = inlined_call_operand.hbm [shape: f32[2,8,128], index: 1, kind: input, shape index: {}]
  %s2 = inlined_call_operand.hbm [shape: f32[2,8,128], index: 2, kind: input, shape index: {}]
  %s3 = inlined_call_operand.vmem [shape: f32[2,8,128], index: 3, kind: input, shape index: {}]
  %s4 = inlined_call_operand.hbm [shape: f32[2,8,128], index: 4, kind: input, shape index: {}]
  %s5 = inlined_call_operand.hbm [shape: f32[2,8,128], index: 5, kind: output, shape index: {}]
  %s6 = sld [smem:[#allocation0]]
  $region61: #{tpu_custom_call.1} parent=0
    _
  %s8 = ssub.s32 1, %s6
  %s9 = scalar_select 0, %s8, %s6
  %s10 = sshll.u32 %s0, 4
  %s11 = int_to_ptr.vmem [resolvable:$true] %s10
  %13 = dma.vmem_to_smem %s11, 64, [#allocation3], [#allocation2]
  %14 = dma.done [#allocation2], 64
  %15 = sfence
  $region1: #{tpu_custom_call.1} parent=0
    #allocation4 [shape = 'u8[8192]{0}', space=vmem, size = 0x2000, scoped, tag = 'input window, operand 1']
    #allocation5 [shape = 's32[2]{0}', space=sflag, size = 0x8, scoped, tag = 'scoped memory for tpu_custom_call.1']
    #allocation6 [shape = 's32[2]{0}', space=sflag, size = 0x8, scoped, tag = 'scoped memory for tpu_custom_call.1']
    #allocation7 [shape = 'u8[8192]{0}', space=vmem, size = 0x2000, scoped, tag = 'input window, operand 2']
    #allocation8 [shape = 's32[2]{0}', space=sflag, size = 0x8, scoped, tag = 'scoped memory for tpu_custom_call.1']
    #allocation9 [shape = 'u8[8192]{0}', space=vmem, size = 0x2000, scoped, tag = 'input window, operand 4']
    #allocation10 [shape = 'u8[8192]{0}', space=vmem, size = 0x2000, scoped, tag = 'output window, operand 0']
    %16 = vsyncpa [#allocation5], 0
    %s17 = scalar_lea.sflag [#allocation5], 1
    %18 = vsyncpa %s17, 0
    %19 = vsyncpa [#allocation8], 0
    %s20 = scalar_lea.sflag [#allocation8], 1
    %21 = vsyncpa %s20, 0
    %22 = vsyncpa [#allocation6], 0
    %s23 = scalar_lea.sflag [#allocation6], 1
    %24 = vsyncpa %s23, 0
    loop: start=0, step=1, limit=4
    $region2: #{tpu_custom_call.1} parent=1 // loop_pre_header
      _
    $region3: #{tpu_custom_call.1} parent=1 // loop_header
      %s26 = sphi 0, %s30
      %p27 = scmp.ge.s32.totalorder %s26, 4
      %s33 = sphi 0, %s45
      %s34 = sphi 0, %s41
      %s35 = sphi 0, %s33
      %s36 = sphi 0, %s34
      %s37 = sphi 0, %s35
      %s38 = sphi 0, %s36
      %s50 = sphi 0, %s52
      %s53 = sphi 0, %s50
      %s54 = sphi 0, %s53
      %s70 = sphi 0, %s54
      %s78 = sphi 0, %s80
      %s81 = sphi 0, %s78
      %s82 = sphi 0, %s81
      %s98 = sphi 0, %s82
      %s106 = sphi 0, %s108
      %s109 = sphi 0, %s106
      %s110 = sphi 0, %s109
      %s126 = sphi 0, %s110
      %s134 = sphi 0, %s136
      %s137 = sphi 0, %s134
      %s138 = sphi 0, %s137
      %s154 = sphi 0, %s138
      %s162 = sphi 0, %s164
      %s165 = sphi 0, %s162
      %s166 = sphi 0, %s165
      %s182 = sphi 0, %s166
    $region4: #{tpu_custom_call.1} parent=1 // loop_header_branch
      %29 = sbr.rel (%p27) target = $region8
    $region5: #{tpu_custom_call.1} parent=1 // loop_body
      %s31 = ssub.s32 %s26, 1
      %s32 = ssub.s32 %s26, 2
      %s39 = sadd.s32 1, %s34
      %p40 = scmp.ge.s32.totalorder %s39, 1
      %s41 = scalar_select %p40, 0, %s39
      %s42 = sadd.s32 1, %s33
      %s43 = scalar_select %p40, %s42, %s33
      %p44 = scmp.ge.s32.totalorder %s43, 2
      %s45 = scalar_select %p44, 0, %s43
      %s46 = ssub.s32 %s33, %s45
      %s47 = ssub.s32 %s34, %s41
      %s48 = sor.u32 %s46, %s47
      %p49 = scmp.eq.s32.totalorder %s48, 0
      %s51 = sadd.s32 %s50, 1
      %s52 = scalar_select %p49, %s50, %s51
      %p55 = pneg %p49
      %p56 = scmp.eq.s32.totalorder %s26, 1
      %p57 = por %p55, %p56
      %p58 = scmp.ne.s32.totalorder %s50, %s53
      %p59 = scmp.eq.s32.totalorder %s26, 0
      %p60 = por %p58, %p59
      %p61 = scmp.ne.s32.totalorder %s50, %s53
      %p62 = scmp.eq.s32.totalorder %s31, 1
      %p63 = por %p61, %p62
      %p64 = scmp.ne.s32.totalorder %s53, %s54
      %p65 = scmp.eq.s32.totalorder %s31, 0
      %p66 = por %p64, %p65
      %p67 = scmp.ne.s32.totalorder %s53, %s54
      %p68 = scmp.eq.s32.totalorder %s32, 1
      %p69 = por %p67, %p68
      %p71 = scmp.ne.s32.totalorder %s54, %s70
      %p72 = scmp.eq.s32.totalorder %s32, 0
      %p73 = por %p71, %p72
      %s74 = ssub.s32 %s33, %s45
      %s75 = ssub.s32 %s34, %s41
      %s76 = sor.u32 %s74, %s75
      %p77 = scmp.eq.s32.totalorder %s76, 0
      %s79 = sadd.s32 %s78, 1
      %s80 = scalar_select %p77, %s78, %s79
      %p83 = pneg %p77
      %p84 = scmp.eq.s32.totalorder %s26, 1
      %p85 = por %p83, %p84
      %p86 = scmp.ne.s32.totalorder %s78, %s81
      %p87 = scmp.eq.s32.totalorder %s26, 0
      %p88 = por %p86, %p87
      %p89 = scmp.ne.s32.totalorder %s78, %s81
      %p90 = scmp.eq.s32.totalorder %s31, 1
      %p91 = por %p89, %p90
      %p92 = scmp.ne.s32.totalorder %s81, %s82
      %p93 = scmp.eq.s32.totalorder %s31, 0
      %p94 = por %p92, %p93
      %p95 = scmp.ne.s32.totalorder %s81, %s82
      %p96 = scmp.eq.s32.totalorder %s32, 1
      %p97 = por %p95, %p96
      %p99 = scmp.ne.s32.totalorder %s82, %s98
      %p100 = scmp.eq.s32.totalorder %s32, 0
      %p101 = por %p99, %p100
      %s102 = ssub.s32 %s33, %s45
      %s103 = ssub.s32 %s34, %s41
      %s104 = sor.u32 %s102, %s103
      %p105 = scmp.eq.s32.totalorder %s104, 0
      %s107 = sadd.s32 %s106, 1
      %s108 = scalar_select %p105, %s106, %s107
      %p111 = pneg %p105
      %p112 = scmp.eq.s32.totalorder %s26, 1
      %p113 = por %p111, %p112
      %p114 = scmp.ne.s32.totalorder %s106, %s109
      %p115 = scmp.eq.s32.totalorder %s26, 0
      %p116 = por %p114, %p115
      %p117 = scmp.ne.s32.totalorder %s106, %s109
      %p118 = scmp.eq.s32.totalorder %s31, 1
      %p119 = por %p117, %p118
      %p120 = scmp.ne.s32.totalorder %s109, %s110
      %p121 = scmp.eq.s32.totalorder %s31, 0
      %p122 = por %p120, %p121
      %p123 = scmp.ne.s32.totalorder %s109, %s110
      %p124 = scmp.eq.s32.totalorder %s32, 1
      %p125 = por %p123, %p124
      %p127 = scmp.ne.s32.totalorder %s110, %s126
      %p128 = scmp.eq.s32.totalorder %s32, 0
      %p129 = por %p127, %p128
      %s130 = ssub.s32 %s33, %s45
      %s131 = ssub.s32 %s34, %s41
      %s132 = sor.u32 %s130, %s131
      %p133 = scmp.eq.s32.totalorder %s132, 0
      %s135 = sadd.s32 %s134, 1
      %s136 = scalar_select %p133, %s134, %s135
      %p139 = pneg %p133
      %p140 = scmp.eq.s32.totalorder %s26, 1
      %p141 = por %p139, %p140
      %p142 = scmp.ne.s32.totalorder %s134, %s137
      %p143 = scmp.eq.s32.totalorder %s26, 0
      %p144 = por %p142, %p143
      %p145 = scmp.ne.s32.totalorder %s134, %s137
      %p146 = scmp.eq.s32.totalorder %s31, 1
      %p147 = por %p145, %p146
      %p148 = scmp.ne.s32.totalorder %s137, %s138
      %p149 = scmp.eq.s32.totalorder %s31, 0
      %p150 = por %p148, %p149
      %p151 = scmp.ne.s32.totalorder %s137, %s138
      %p152 = scmp.eq.s32.totalorder %s32, 1
      %p153 = por %p151, %p152
      %p155 = scmp.ne.s32.totalorder %s138, %s154
      %p156 = scmp.eq.s32.totalorder %s32, 0
      %p157 = por %p155, %p156
      %s158 = ssub.s32 %s33, %s45
      %s159 = ssub.s32 %s34, %s41
      %s160 = sor.u32 %s158, %s159
      %p161 = scmp.eq.s32.totalorder %s160, 0
      %s163 = sadd.s32 %s162, 1
      %s164 = scalar_select %p161, %s162, %s163
      %p167 = pneg %p161
      %p168 = scmp.eq.s32.totalorder %s26, 1
      %p169 = por %p167, %p168
      %p170 = scmp.ne.s32.totalorder %s162, %s165
      %p171 = scmp.eq.s32.totalorder %s26, 0
      %p172 = por %p170, %p171
      %p173 = scmp.ne.s32.totalorder %s162, %s165
      %p174 = scmp.eq.s32.totalorder %s31, 1
      %p175 = por %p173, %p174
      %p176 = scmp.ne.s32.totalorder %s165, %s166
      %p177 = scmp.eq.s32.totalorder %s31, 0
      %p178 = por %p176, %p177
      %p179 = scmp.ne.s32.totalorder %s165, %s166
      %p180 = scmp.eq.s32.totalorder %s32, 1
      %p181 = por %p179, %p180
      %p183 = scmp.ne.s32.totalorder %s166, %s182
      %p184 = scmp.eq.s32.totalorder %s32, 0
      %p185 = por %p183, %p184
      %p186 = scmp.le.s32.totalorder 1, %s26
      %p187 = scmp.lt.s32.totalorder %s26, 3
      %p188 = pnand %p186, %p187
      %p189 = pneg %p188
      // Predicated region
      $region9: #{tpu_custom_call.1} parent=5 // pred_check
        _
      $region10: #{tpu_custom_call.1} parent=5 // pred_check_branch
        %191 = sbr.rel (%p188) target = $region12
      $region11: #{tpu_custom_call.1} parent=5 // pred_region
        %s192 = ssub.s32 %s26, 1
      $region12: #{tpu_custom_call.1} parent=5 // pred_fallthru
        _
      %p193 = scmp.lt.s32.totalorder %s26, 2
      // Predicated region
      $region13: #{tpu_custom_call.1} parent=5 // pred_check
        %p194 = pneg %p193
      $region14: #{tpu_custom_call.1} parent=5 // pred_check_branch
        %196 = sbr.rel (%p194) target = $region16
      $region15: #{tpu_custom_call.1} parent=5 // pred_region
        // Predicated region
        $region17: #{tpu_custom_call.1} parent=15 // pred_check
          %p197 = pneg %p60
        $region18: #{tpu_custom_call.1} parent=15 // pred_check_branch
          %199 = sbr.rel (%p197) target = $region20
        $region19: #{tpu_custom_call.1} parent=15 // pred_region
          %s200 = sand.u32 %s50, 1
          %s201 = scalar_lea.sflag [#allocation5], %s200
          %s202 = sand.u32 %s50, 1
          %s203 = smul.addr %s202, 8
          %s204 = scalar_lea.vmem [#allocation4], %s203
          %s206 = ssub.s32 128, 128
          %207 = vsyncadd %s201, %s206
          %s208 = sadd.s32 %s34, %s33
          %s209 = smul.addr %s208, 128
          %s210 = scalar_lea.hbm %s1, %s209
          %s212 = sshll.u32 %s204, 4
          %s213 = int_to_ptr.vmem [resolvable:$true] %s212
          %215 = dma.hbm_to_vmem [thread:$0]  %s210, 128, %s213, %s201
        $region20: #{tpu_custom_call.1} parent=15 // pred_fallthru
          _
        // Predicated region
        $region21: #{tpu_custom_call.1} parent=15 // pred_check
          %p216 = pneg %p88
        $region22: #{tpu_custom_call.1} parent=15 // pred_check_branch
          %218 = sbr.rel (%p216) target = $region24
        $region23: #{tpu_custom_call.1} parent=15 // pred_region
          %s219 = sand.u32 %s26, 1
          %s220 = scalar_lea.sflag [#allocation8], %s219
          %s221 = sand.u32 %s78, 1
          %s222 = smul.addr %s221, 8
          %s223 = scalar_lea.vmem [#allocation7], %s222
          %s225 = ssub.s32 128, 128
          %226 = vsyncadd %s220, %s225
          %s227 = sadd.s32 %s34, %s33
          %s228 = smul.addr %s227, 128
          %s229 = scalar_lea.hbm %s2, %s228
          %s231 = sshll.u32 %s223, 4
          %s232 = int_to_ptr.vmem [resolvable:$true] %s231
          %234 = dma.hbm_to_vmem [thread:$0]  %s229, 128, %s232, %s220
        $region24: #{tpu_custom_call.1} parent=15 // pred_fallthru
          _
        // Predicated region
        $region25: #{tpu_custom_call.1} parent=15 // pred_check
          %p235 = pneg %p116
        $region26: #{tpu_custom_call.1} parent=15 // pred_check_branch
          %237 = sbr.rel (%p235) target = $region28
        $region27: #{tpu_custom_call.1} parent=15 // pred_region
          %p238 = scmp.lt.s32.totalorder %s33, 1
          %s239 = scalar_select %p238, %s33, 1
          %p240 = scmp.lt.s32.totalorder %s34, 0
          %s241 = scalar_select %p240, %s34, 0
          %s242 = sadd.s32 %s241, %s239
          %s243 = smul.addr %s242, 8
          %s244 = scalar_lea.vmem %s3, %s243
        $region28: #{tpu_custom_call.1} parent=15 // pred_fallthru
          _
        // Predicated region
        $region29: #{tpu_custom_call.1} parent=15 // pred_check
          %p245 = pneg %p144
        $region30: #{tpu_custom_call.1} parent=15 // pred_check_branch
          %247 = sbr.rel (%p245) target = $region32
        $region31: #{tpu_custom_call.1} parent=15 // pred_region
          %s248 = sand.u32 %s26, 1
          %s249 = scalar_lea.sflag [#allocation8], %s248
          %s250 = sand.u32 %s134, 1
          %s251 = smul.addr %s250, 8
          %s252 = scalar_lea.vmem [#allocation9], %s251
          %s254 = ssub.s32 128, 128
          %255 = vsyncadd %s249, %s254
          %s256 = sadd.s32 %s34, %s33
          %s257 = smul.addr %s256, 128
          %s258 = scalar_lea.hbm %s4, %s257
          %s260 = sshll.u32 %s252, 4
          %s261 = int_to_ptr.vmem [resolvable:$true] %s260
          %263 = dma.hbm_to_vmem [thread:$0]  %s258, 128, %s261, %s249
        $region32: #{tpu_custom_call.1} parent=15 // pred_fallthru
          _
      $region16: #{tpu_custom_call.1} parent=5 // pred_fallthru
        _
      %p264 = scmp.le.s32.totalorder 1, %s26
      %p265 = scmp.lt.s32.totalorder %s26, 3
      %p266 = pnand %p264, %p265
      %p267 = pneg %p266
      // Predicated region
      $region33: #{tpu_custom_call.1} parent=5 // pred_check
        _
      $region34: #{tpu_custom_call.1} parent=5 // pred_check_branch
        %269 = sbr.rel (%p266) target = $region36
      $region35: #{tpu_custom_call.1} parent=5 // pred_region
        %s270 = ssub.s32 %s26, 1
        %s271 = sand.u32 %s53, 1
        %s272 = scalar_lea.sflag [#allocation5], %s271
        %s273 = sand.u32 %s53, 1
        %s274 = smul.addr %s273, 8
        %s275 = scalar_lea.vmem [#allocation4], %s274
        // Predicated region
        $region37: #{tpu_custom_call.1} parent=35 // pred_check
          %p276 = pneg %p66
        $region38: #{tpu_custom_call.1} parent=35 // pred_check_branch
          %278 = sbr.rel (%p276) target = $region40
        $region39: #{tpu_custom_call.1} parent=35 // pred_region
          %279 = dma.done %s272, 128
        $region40: #{tpu_custom_call.1} parent=35 // pred_fallthru
          _
        %s280 = sand.u32 %s31, 1
        %s281 = scalar_lea.sflag [#allocation8], %s280
        %s282 = sand.u32 %s81, 1
        %s283 = smul.addr %s282, 8
        %s284 = scalar_lea.vmem [#allocation7], %s283
        // Predicated region
        $region41: #{tpu_custom_call.1} parent=35 // pred_check
          %p285 = pneg %p94
        $region42: #{tpu_custom_call.1} parent=35 // pred_check_branch
          %287 = sbr.rel (%p285) target = $region44
        $region43: #{tpu_custom_call.1} parent=35 // pred_region
          %288 = dma.done %s281, 128
        $region44: #{tpu_custom_call.1} parent=35 // pred_fallthru
          _
        %s289 = sand.u32 %s31, 1
        %s290 = scalar_lea.sflag [#allocation8], %s289
        %s291 = sand.u32 %s137, 1
        %s292 = smul.addr %s291, 8
        %s293 = scalar_lea.vmem [#allocation9], %s292
        // Predicated region
        $region45: #{tpu_custom_call.1} parent=35 // pred_check
          %p294 = pneg %p150
        $region46: #{tpu_custom_call.1} parent=35 // pred_check_branch
          %296 = sbr.rel (%p294) target = $region48
        $region47: #{tpu_custom_call.1} parent=35 // pred_region
          %297 = dma.done %s290, 128
        $region48: #{tpu_custom_call.1} parent=35 // pred_fallthru
          _
        %s298 = sand.u32 %s53, 1
        %s299 = scalar_lea.sflag [#allocation5], %s298
        %s300 = sand.u32 %s53, 1
        %s301 = smul.addr %s300, 8
        %s302 = scalar_lea.vmem [#allocation4], %s301
        %p303 = pneg %p66
        %p304 = pneg %p63
        %s305 = sand.u32 %s31, 1
        %s306 = scalar_lea.sflag [#allocation8], %s305
        %s307 = sand.u32 %s81, 1
        %s308 = smul.addr %s307, 8
        %s309 = scalar_lea.vmem [#allocation7], %s308
        %p310 = pneg %p94
        %p311 = pneg %p91
        %p312 = scmp.lt.s32.totalorder %s35, 1
        %s313 = scalar_select %p312, %s35, 1
        %p314 = scmp.lt.s32.totalorder %s36, 0
        %s315 = scalar_select %p314, %s36, 0
        %s316 = sadd.s32 %s315, %s313
        %s317 = smul.addr %s316, 8
        %s318 = scalar_lea.vmem %s3, %s317
        %p319 = pneg %p122
        %p320 = pneg %p119
        %s321 = sand.u32 %s31, 1
        %s322 = scalar_lea.sflag [#allocation8], %s321
        %s323 = sand.u32 %s137, 1
        %s324 = smul.addr %s323, 8
        %s325 = scalar_lea.vmem [#allocation9], %s324
        %p326 = pneg %p150
        %p327 = pneg %p147
        %p328 = pneg %p178
        %p329 = pneg %p175
        %s330 = sand.u32 %s165, 1
        %s331 = scalar_lea.sflag [#allocation6], %s330
        %s332 = sand.u32 %s165, 1
        %s333 = smul.addr %s332, 8
        %s334 = scalar_lea.vmem [#allocation10], %s333
        %p335 = scmp.lt.s32.totalorder %s35, 1
        %s336 = scalar_select %p335, %s35, 1
        %p337 = scmp.lt.s32.totalorder %s36, 0
        %s338 = scalar_select %p337, %s36, 0
        %s339 = sadd.s32 %s338, %s336
        %s340 = smul.addr %s339, 8
        %s341 = scalar_lea.vmem %s3, %s340
        %s342 = sld [smem:[#allocation3 + %s35]]
        %s343 = sshra.s32 %s35, 7
        %s344 = sand.u32 %s35, 127
        %s345 = sadd.s32 %s343, 1
        %s346 = smul.u32 %s345, 128
        %s347 = sshra.s32 %s35, 7
        %s348 = sand.u32 %s35, 127
        %s349 = sadd.s32 %s346, %s348
        %s350 = sld [smem:[#allocation3 + %s349]]
        %s351 = sadd.s32 %s343, 2
        %s352 = smul.u32 %s351, 128
        %s353 = sadd.s32 %s352, %s348
        %s354 = sld [smem:[#allocation3 + %s353]]
        %s355 = sadd.s32 %s343, 3
        %s356 = smul.u32 %s355, 128
        %s357 = sadd.s32 %s356, %s348
        %s358 = sld [smem:[#allocation3 + %s357]]
        %v359 = vld [vmem:[%s275] sm:$0xff]
        %v360 = vstv %s342
        %v361 = vmul.f32 %v360, %v359
        %v362 = vld [vmem:[%s284] sm:$0xff]
        %v363 = vstv %s350
        %v364 = vmul.f32 %v363, %v362
        %v365 = vadd.f32 %v361, %v364
        %v366 = vld [vmem:[%s341] sm:$0xff]
        %v367 = vstv %s354
        %v368 = vmul.f32 %v367, %v366
        %v369 = vadd.f32 %v365, %v368
        %v370 = vld [vmem:[%s293] sm:$0xff]
        %v371 = vstv %s358
        %v372 = vmul.f32 %v371, %v370
        %v373 = vadd.f32 %v369, %v372
        %374 = vst [vmem:[%s334] sm:$0xff] %v373
        %s375 = sand.u32 %s165, 1
        %s376 = scalar_lea.sflag [#allocation6], %s375
        %s377 = sand.u32 %s165, 1
        %s378 = smul.addr %s377, 8
        %s379 = scalar_lea.vmem [#allocation10], %s378
        // Predicated region
        $region49: #{tpu_custom_call.1} parent=35 // pred_check
          %p380 = pneg %p175
        $region50: #{tpu_custom_call.1} parent=35 // pred_check_branch
          %382 = sbr.rel (%p380) target = $region52
        $region51: #{tpu_custom_call.1} parent=35 // pred_region
          %s384 = ssub.s32 128, 128
          %385 = vsyncadd %s376, %s384
          %s386 = sadd.s32 %s36, %s35
          %s387 = smul.addr %s386, 128
          %s388 = scalar_lea.hbm %s5, %s387
          %s390 = sshll.u32 %s379, 4
          %s391 = int_to_ptr.vmem [resolvable:$true] %s390
          %393 = dma.vmem_to_hbm [thread:$0]  %s391, 128, %s388, %s376
        $region52: #{tpu_custom_call.1} parent=35 // pred_fallthru
          _
      $region36: #{tpu_custom_call.1} parent=5 // pred_fallthru
        _
      %p394 = scmp.le.s32.totalorder 2, %s26
      // Predicated region
      $region53: #{tpu_custom_call.1} parent=5 // pred_check
        %p395 = pneg %p394
      $region54: #{tpu_custom_call.1} parent=5 // pred_check_branch
        %397 = sbr.rel (%p395) target = $region56
      $region55: #{tpu_custom_call.1} parent=5 // pred_region
        %s398 = ssub.s32 %s26, 2
        // Predicated region
        $region57: #{tpu_custom_call.1} parent=55 // pred_check
          %p399 = pneg %p181
        $region58: #{tpu_custom_call.1} parent=55 // pred_check_branch
          %401 = sbr.rel (%p399) target = $region60
        $region59: #{tpu_custom_call.1} parent=55 // pred_region
          %s402 = sand.u32 %s166, 1
          %s403 = scalar_lea.sflag [#allocation6], %s402
          %s404 = sand.u32 %s166, 1
          %s405 = smul.addr %s404, 8
          %s406 = scalar_lea.vmem [#allocation10], %s405
          %407 = dma.done %s403, 128
        $region60: #{tpu_custom_call.1} parent=55 // pred_fallthru
          _
      $region56: #{tpu_custom_call.1} parent=5 // pred_fallthru
        _
    $region6: #{tpu_custom_call.1} parent=1 // loop_footer
      %s30 = sadd.s32 1, %s26
    $region7: #{tpu_custom_call.1} parent=1 // loop_footer_branch
      %25 = sbr.rel target = $region3
    $region8: #{tpu_custom_call.1} parent=1 // loop_exit
      _
    %408 = vsyncpa [#allocation5], 1
    %s409 = scalar_lea.sflag [#allocation5], 1
    %410 = vsyncpa %s409, 1
    %411 = vsyncpa [#allocation8], 1
    %s412 = scalar_lea.sflag [#allocation8], 1
    %413 = vsyncpa %s412, 1
    %414 = vsyncpa [#allocation6], 1
    %s415 = scalar_lea.sflag [#allocation6], 1
    %416 = vsyncpa %s415, 1

</llo_original>
